<compile_context>
chip_gen: v7x
topology: tpu7x:2x2x1
jax: 0.10.0
libtpu: 0.0.40
codegen_flags: <defaults>
</compile_context>

<pallas_src>
import functools
import math

import jax
import jax.numpy as jnp
from jax.experimental import pallas as pl
from jax.experimental.pallas import tpu as pltpu

_LANE = 128
_SUBLANE = 8
_BN_EPS = 1e-5


def _round_up(n, m):
    return ((n + m - 1) // m) * m


def _cdiv(a, b):
    return (a + b - 1) // b


def _gelu_tanh(x):
    c = math.sqrt(2.0 / math.pi)
    return 0.5 * x * (1.0 + jnp.tanh(c * (x + 0.044715 * x * x * x)))


# --------------------------------------------------------------------------
# Kernel
# --------------------------------------------------------------------------
def _mlp_kernel(x_ref, *rest, num_layers):
    # rest = (w0, s0, w1, s1, ..., w_last, s_last, o_ref)
    o_ref = rest[-1]
    params = rest[:-1]
    h = x_ref[...].astype(jnp.bfloat16)            # bf16 MXU operands
    for li in range(num_layers):
        w_ref = params[2 * li]                     # (K, Np)  bf16
        s_ref = params[2 * li + 1]                 # (1, Np)  f32 fused bias+BN shift
        y = jnp.dot(h, w_ref[...], preferred_element_type=jnp.float32)
        y = y + s_ref[...]                         # f32 shift-add
        if li < num_layers - 1:                    # hidden: GELU (dropout = identity)
            y = _gelu_tanh(y)                      # f32 VPU/EUP math
            h = y.astype(jnp.bfloat16)
        else:
            h = y
    o_ref[...] = h.astype(o_ref.dtype)


# --------------------------------------------------------------------------
# Wrapper
# --------------------------------------------------------------------------
def _choose_batch_tile(B):
    """Rows per grid step.

    Large tiles amortize the ~0.35us/step overhead and keep HBM DMAs big
    (512-row tiles ~85% of HBM roofline vs ~29% at 128), but keep >= 2 grid
    steps when the batch allows it so both v7x TensorCores get work.
    """
    if B <= _SUBLANE:
        return B                                   # block == full array dim (legal)
    half = (B + 1) // 2
    return min(512, _round_up(half, _SUBLANE))     # multiple of 8, <= 512


def _vmem_limit_bytes(tb, d0, x_itemsize, params):
    act_w = max(w.shape[1] for w, _ in params)
    out_p = params[-1][0].shape[1]
    b = 2 * tb * d0 * x_itemsize                   # x tile (double-buffered)
    b += 2 * tb * out_p * 4                        # out tile (double-buffered)
    for w, s in params:                            # resident weights (default 2x bufs)
        b += 2 * (w.size * w.dtype.itemsize + s.size * s.dtype.itemsize)
    b += 6 * tb * act_w * 4                        # live activations / temporaries
    b = int(b * 1.25) + (2 << 20)                  # headroom
    return max(32 << 20, min(b, 64 << 20))         # cap at v7x physical VMEM


def mlp_forward(x, padded_params, *, tb, vmem_limit):
    """x: (B, D0) any float dtype; padded_params: [(W bf16, shift f32), ...]."""
    B, D0 = x.shape
    num_layers = len(padded_params)
    out_p = padded_params[-1][0].shape[1]
    nb = _cdiv(B, tb)

    in_specs = [pl.BlockSpec((tb, D0), lambda i: (i, 0))]
    args = [x]
    flops = 0
    transcendentals = 0
    bytes_accessed = x.size * x.dtype.itemsize + B * out_p * 4
    for li, (wp, sp) in enumerate(padded_params):
        din, dout = wp.shape
        in_specs.append(pl.BlockSpec((din, dout), lambda i: (0, 0)))
        in_specs.append(pl.BlockSpec((1, dout), lambda i: (0, 0)))
        args += [wp, sp]
        flops += 2 * nb * tb * din * dout
        bytes_accessed += wp.size * wp.dtype.itemsize + sp.size * sp.dtype.itemsize
        if li < num_layers - 1:
            transcendentals += nb * tb * dout

    kernel = functools.partial(_mlp_kernel, num_layers=num_layers)
    return pl.pallas_call(
        kernel,
        out_shape=jax.ShapeDtypeStruct((B, out_p), jnp.float32),
        grid_spec=pltpu.PrefetchScalarGridSpec(
            num_scalar_prefetch=0,
            grid=(nb,),
            in_specs=in_specs,
            out_specs=pl.BlockSpec((tb, out_p), lambda i: (i, 0)),
        ),
        compiler_params=pltpu.CompilerParams(
            dimension_semantics=("parallel",),
            vmem_limit_bytes=vmem_limit,
        ),
        cost_estimate=pl.CostEstimate(
            flops=flops,
            transcendentals=transcendentals,
            bytes_accessed=bytes_accessed,
        ),
    )(*args)


# --------------------------------------------------------------------------
# Module port
# --------------------------------------------------------------------------
class MLPPallas:
    """JAX/Pallas port of MLP(input_dim, embed_dims, dropout), inference mode.

    torch.nn.Linear stores weight as (out, in); here weights are stored
    pre-transposed as (in, out).  BatchNorm1d running stats are folded into
    the preceding Linear.  Dropout is identity at inference.
    """

    def __init__(self, input_dim, embed_dims, dropout, key):
        self.input_dim = int(input_dim)
        self.embed_dims = tuple(int(d) for d in embed_dims)
        self.dropout = dropout
        self.eps = _BN_EPS

        self.raw_params = []
        din = self.input_dim
        for dout in self.embed_dims:
            key, kw, kb = jax.random.split(key, 3)
            bound = 1.0 / math.sqrt(din)
            w = jax.random.uniform(kw, (din, dout), minval=-bound, maxval=bound,
                                   dtype=jnp.float32)
            b = jax.random.uniform(kb, (dout,), minval=-bound, maxval=bound,
                                   dtype=jnp.float32)
            self.raw_params.append(dict(
                w=w, b=b,
                gamma=jnp.ones((dout,), jnp.float32),
                beta=jnp.zeros((dout,), jnp.float32),
                mean=jnp.zeros((dout,), jnp.float32),
                var=jnp.ones((dout,), jnp.float32)))
            din = dout

        key, kw, kb = jax.random.split(key, 3)
        bound = 1.0 / math.sqrt(din)
        wf = jax.random.uniform(kw, (din, 1), minval=-bound, maxval=bound,
                                dtype=jnp.float32)
        bf = jax.random.uniform(kb, (1,), minval=-bound, maxval=bound,
                                dtype=jnp.float32)
        self.final = (wf, bf)

        self._build_padded()

    def _build_padded(self):
        padded = []
        din_real = self.input_dim      # layer-0 K stays at the REAL input dim
        din_k = self.input_dim         # K dim of the weight as seen by the kernel
        for p in self.raw_params:
            w, b = p["w"], p["b"]
            dout = w.shape[1]
            s = p["gamma"] / jnp.sqrt(p["var"] + self.eps)     # BN scale
            w_fused = w * s[None, :]                           # fold into W
            shift = b * s + p["beta"] - p["mean"] * s          # fused shift
            dout_p = _round_up(dout, _LANE)                    # lane-dense N
            wp = jnp.zeros((din_k, dout_p), jnp.float32).at[:din_real, :dout].set(w_fused)
            sp = jnp.zeros((1, dout_p), jnp.float32).at[0, :dout].set(shift)
            padded.append((wp.astype(jnp.bfloat16), sp))       # bf16 MXU weights
            din_real, din_k = dout, dout_p

        wf, bf = self.final
        out_p = _LANE                  # lane-dense output tile; real data in col 0
        wfp = jnp.zeros((din_k, out_p), jnp.float32).at[:din_real, :1].set(wf)
        bfp = jnp.zeros((1, out_p), jnp.float32).at[0, :1].set(bf)
        padded.append((wfp.astype(jnp.bfloat16), bfp))
        self.padded_params = padded

    def __call__(self, x):
        B, D = x.shape
        assert D == self.input_dim
        tb = _choose_batch_tile(B)
        vmem_limit = _vmem_limit_bytes(tb, D, x.dtype.itemsize, self.padded_params)
        out = mlp_forward(x, self.padded_params, tb=tb, vmem_limit=vmem_limit)
        return out[:, :1]


# --------------------------------------------------------------------------
# References
# --------------------------------------------------------------------------
def _reference_module_f32(x, model):
    """Eval-mode module math, full f32: (Linear -> BN(running) -> GELU -> Dropout(id))* -> Linear."""
    h = x.astype(jnp.float32)
    for p in model.raw_params:
        y = h @ p["w"] + p["b"]
        y = (y - p["mean"]) / jnp.sqrt(p["var"] + model.eps) * p["gamma"] + p["beta"]
        h = _gelu_tanh(y)
    wf, bf = model.final
    return h @ wf + bf


def _reference_kernel_numerics(x, model):
    """Same math as the kernel: folded BN, bf16 dot operands, f32 accumulation."""
    h = x.astype(jnp.float32)
    n = len(model.padded_params)
    for li, (wp, sp) in enumerate(model.padded_params):
        y = jnp.dot(h.astype(jnp.bfloat16), wp, preferred_element_type=jnp.float32) + sp
        h = _gelu_tanh(y) if li < n - 1 else y
    return h[:, :1]


if __name__ == "__main__":
    key = jax.random.PRNGKey(0)
    B, input_dim = 8, 32
    embed_dims = (64, 32)
    dropout = 0.1

    key, kx, kp = jax.random.split(key, 3)
    x = jax.random.normal(kx, (B, input_dim), dtype=jnp.float32)

    model = MLPPallas(input_dim, embed_dims, dropout, kp)
    out = jax.block_until_ready(model(x))

    assert out.shape == (B, 1), out.shape
    ref_exact = _reference_kernel_numerics(x, model)   # mirrors kernel numerics
    ref_f32 = _reference_module_f32(x, model)          # original module, f32
    err_exact = float(jnp.max(jnp.abs(out - ref_exact)))
    err_f32 = float(jnp.max(jnp.abs(out - ref_f32)))
    assert err_exact < 2e-3, f"kernel-numerics mismatch: max|err|={err_exact}"
    assert err_f32 < 1e-1, f"module-f32 mismatch: max|err|={err_f32}"

    print("KERNEL_OK")
</pallas_src>

<mosaic_0001>
module attributes {stable_mosaic.version = 11 : i64} {
  func.func @_mlp_kernel(%arg0: i32, %arg1: memref<8x32xf32, #tpu.memory_space<vmem>>, %arg2: memref<32x128xbf16, #tpu.memory_space<vmem>>, %arg3: memref<1x128xf32, #tpu.memory_space<vmem>>, %arg4: memref<128x128xbf16, #tpu.memory_space<vmem>>, %arg5: memref<1x128xf32, #tpu.memory_space<vmem>>, %arg6: memref<128x128xbf16, #tpu.memory_space<vmem>>, %arg7: memref<1x128xf32, #tpu.memory_space<vmem>>, %arg8: memref<8x128xf32, #tpu.memory_space<vmem>>) attributes {dimension_semantics = [#tpu.dimension_semantics<parallel>], iteration_bounds = array<i64: 1>, scalar_prefetch = 0 : i64, scratch_operands = 0 : i64, tpu.core_type = #tpu.core_type<tc>, window_params = [{transform_indices = @transform_0, window_bounds = array<i64: 8, 32>}, {pipeline_mode = #tpu.pipeline_mode<synchronous>, transform_indices = @transform_1, window_bounds = array<i64: 32, 128>}, {pipeline_mode = #tpu.pipeline_mode<synchronous>, transform_indices = @transform_2, window_bounds = array<i64: 1, 128>}, {pipeline_mode = #tpu.pipeline_mode<synchronous>, transform_indices = @transform_3, window_bounds = array<i64: 128, 128>}, {pipeline_mode = #tpu.pipeline_mode<synchronous>, transform_indices = @transform_4, window_bounds = array<i64: 1, 128>}, {pipeline_mode = #tpu.pipeline_mode<synchronous>, transform_indices = @transform_5, window_bounds = array<i64: 128, 128>}, {pipeline_mode = #tpu.pipeline_mode<synchronous>, transform_indices = @transform_6, window_bounds = array<i64: 1, 128>}, {transform_indices = @transform_7, window_bounds = array<i64: 8, 128>}]} {
    %c0 = arith.constant 0 : index
    %c0_0 = arith.constant 0 : index
    %0 = vector.load %arg1[%c0, %c0_0] : memref<8x32xf32, #tpu.memory_space<vmem>>, vector<8x32xf32>
    %1 = arith.truncf %0 : vector<8x32xf32> to vector<8x32xbf16>
    %c0_1 = arith.constant 0 : index
    %c0_2 = arith.constant 0 : index
    %2 = vector.load %arg2[%c0_1, %c0_2] : memref<32x128xbf16, #tpu.memory_space<vmem>>, vector<32x128xbf16>
    %cst = arith.constant dense<0.000000e+00> : vector<8x128xf32>
    %3 = tpu.matmul %1, %2, %cst {dimension_numbers = #tpu.dot_dimension_numbers<[1], [0], [0], [1], [0, 0, 1, 1], [], []>} : vector<8x32xbf16>, vector<32x128xbf16>, vector<8x128xf32> -> vector<8x128xf32>
    %c0_3 = arith.constant 0 : index
    %c0_4 = arith.constant 0 : index
    %4 = vector.load %arg3[%c0_3, %c0_4] : memref<1x128xf32, #tpu.memory_space<vmem>>, vector<1x128xf32>
    %5 = vector.broadcast %4 : vector<1x128xf32> to vector<8x128xf32>
    %6 = arith.addf %3, %5 : vector<8x128xf32>
    %cst_5 = arith.constant 5.000000e-01 : f32
    %7 = vector.broadcast %cst_5 : f32 to vector<8x128xf32>
    %8 = arith.mulf %7, %6 : vector<8x128xf32>
    %cst_6 = arith.constant 4.471500e-02 : f32
    %9 = vector.broadcast %cst_6 : f32 to vector<8x128xf32>
    %10 = arith.mulf %9, %6 : vector<8x128xf32>
    %11 = arith.mulf %10, %6 : vector<8x128xf32>
    %12 = arith.mulf %11, %6 : vector<8x128xf32>
    %13 = arith.addf %6, %12 : vector<8x128xf32>
    %cst_7 = arith.constant 0.797884583 : f32
    %14 = vector.broadcast %cst_7 : f32 to vector<8x128xf32>
    %15 = arith.mulf %14, %13 : vector<8x128xf32>
    %16 = math.tanh %15 : vector<8x128xf32>
    %cst_8 = arith.constant 1.000000e+00 : f32
    %17 = vector.broadcast %cst_8 : f32 to vector<8x128xf32>
    %18 = arith.addf %17, %16 : vector<8x128xf32>
    %19 = arith.mulf %8, %18 : vector<8x128xf32>
    %20 = arith.truncf %19 : vector<8x128xf32> to vector<8x128xbf16>
    %c0_9 = arith.constant 0 : index
    %c0_10 = arith.constant 0 : index
    %21 = vector.load %arg4[%c0_9, %c0_10] : memref<128x128xbf16, #tpu.memory_space<vmem>>, vector<128x128xbf16>
    %cst_11 = arith.constant dense<0.000000e+00> : vector<8x128xf32>
    %22 = tpu.matmul %20, %21, %cst_11 {dimension_numbers = #tpu.dot_dimension_numbers<[1], [0], [0], [1], [0, 0, 1, 1], [], []>} : vector<8x128xbf16>, vector<128x128xbf16>, vector<8x128xf32> -> vector<8x128xf32>
    %c0_12 = arith.constant 0 : index
    %c0_13 = arith.constant 0 : index
    %23 = vector.load %arg5[%c0_12, %c0_13] : memref<1x128xf32, #tpu.memory_space<vmem>>, vector<1x128xf32>
    %24 = vector.broadcast %23 : vector<1x128xf32> to vector<8x128xf32>
    %25 = arith.addf %22, %24 : vector<8x128xf32>
    %cst_14 = arith.constant 5.000000e-01 : f32
    %26 = vector.broadcast %cst_14 : f32 to vector<8x128xf32>
    %27 = arith.mulf %26, %25 : vector<8x128xf32>
    %cst_15 = arith.constant 4.471500e-02 : f32
    %28 = vector.broadcast %cst_15 : f32 to vector<8x128xf32>
    %29 = arith.mulf %28, %25 : vector<8x128xf32>
    %30 = arith.mulf %29, %25 : vector<8x128xf32>
    %31 = arith.mulf %30, %25 : vector<8x128xf32>
    %32 = arith.addf %25, %31 : vector<8x128xf32>
    %cst_16 = arith.constant 0.797884583 : f32
    %33 = vector.broadcast %cst_16 : f32 to vector<8x128xf32>
    %34 = arith.mulf %33, %32 : vector<8x128xf32>
    %35 = math.tanh %34 : vector<8x128xf32>
    %cst_17 = arith.constant 1.000000e+00 : f32
    %36 = vector.broadcast %cst_17 : f32 to vector<8x128xf32>
    %37 = arith.addf %36, %35 : vector<8x128xf32>
    %38 = arith.mulf %27, %37 : vector<8x128xf32>
    %39 = arith.truncf %38 : vector<8x128xf32> to vector<8x128xbf16>
    %c0_18 = arith.constant 0 : index
    %c0_19 = arith.constant 0 : index
    %40 = vector.load %arg6[%c0_18, %c0_19] : memref<128x128xbf16, #tpu.memory_space<vmem>>, vector<128x128xbf16>
    %cst_20 = arith.constant dense<0.000000e+00> : vector<8x128xf32>
    %41 = tpu.matmul %39, %40, %cst_20 {dimension_numbers = #tpu.dot_dimension_numbers<[1], [0], [0], [1], [0, 0, 1, 1], [], []>} : vector<8x128xbf16>, vector<128x128xbf16>, vector<8x128xf32> -> vector<8x128xf32>
    %c0_21 = arith.constant 0 : index
    %c0_22 = arith.constant 0 : index
    %42 = vector.load %arg7[%c0_21, %c0_22] : memref<1x128xf32, #tpu.memory_space<vmem>>, vector<1x128xf32>
    %43 = vector.broadcast %42 : vector<1x128xf32> to vector<8x128xf32>
    %44 = arith.addf %41, %43 : vector<8x128xf32>
    %c0_23 = arith.constant 0 : index
    %c0_24 = arith.constant 0 : index
    %45 = vector.load %arg8[%c0_23, %c0_24] : memref<8x128xf32, #tpu.memory_space<vmem>>, vector<8x128xf32>
    tpu.vector_store %arg8[%c0_23, %c0_24], %44 {strides = array<i32>} : memref<8x128xf32, #tpu.memory_space<vmem>>, vector<8x128xf32>,
    return
  }
  func.func @transform_0(%arg0: i32) -> (i32, i32) {
    %c0_i32 = arith.constant 0 : i32
    %c0_i32_0 = arith.constant 0 : i32
    return %arg0, %c0_i32 : i32, i32
  }
  func.func @transform_1(%arg0: i32) -> (i32, i32) {
    %c0_i32 = arith.constant 0 : i32
    %c0_i32_0 = arith.constant 0 : i32
    %c0_i32_1 = arith.constant 0 : i32
    return %c0_i32, %c0_i32_0 : i32, i32
  }
  func.func @transform_2(%arg0: i32) -> (i32, i32) {
    %c0_i32 = arith.constant 0 : i32
    %c0_i32_0 = arith.constant 0 : i32
    %c0_i32_1 = arith.constant 0 : i32
    return %c0_i32, %c0_i32_0 : i32, i32
  }
  func.func @transform_3(%arg0: i32) -> (i32, i32) {
    %c0_i32 = arith.constant 0 : i32
    %c0_i32_0 = arith.constant 0 : i32
    %c0_i32_1 = arith.constant 0 : i32
    return %c0_i32, %c0_i32_0 : i32, i32
  }
  func.func @transform_4(%arg0: i32) -> (i32, i32) {
    %c0_i32 = arith.constant 0 : i32
    %c0_i32_0 = arith.constant 0 : i32
    %c0_i32_1 = arith.constant 0 : i32
    return %c0_i32, %c0_i32_0 : i32, i32
  }
  func.func @transform_5(%arg0: i32) -> (i32, i32) {
    %c0_i32 = arith.constant 0 : i32
    %c0_i32_0 = arith.constant 0 : i32
    %c0_i32_1 = arith.constant 0 : i32
    return %c0_i32, %c0_i32_0 : i32, i32
  }
  func.func @transform_6(%arg0: i32) -> (i32, i32) {
    %c0_i32 = arith.constant 0 : i32
    %c0_i32_0 = arith.constant 0 : i32
    %c0_i32_1 = arith.constant 0 : i32
    return %c0_i32, %c0_i32_0 : i32, i32
  }
  func.func @transform_7(%arg0: i32) -> (i32, i32) {
    %c0_i32 = arith.constant 0 : i32
    %c0_i32_0 = arith.constant 0 : i32
    return %arg0, %c0_i32 : i32, i32
  }
}

</mosaic_0001>

<llo_original>
// kernel: tpu_custom_call.1
$region0: #{tpu_custom_call.1}
  #allocation0 [shape = 'u32[]', space=smem, size = 0x4, offset = 0x4, fixed_abs, tag = 'smem constant byte address 0x4 - core index']
  #allocation1 [shape = 'u32[144,128]{1,0:T(1,128)}', space=vmem, size = 0x12000, scoped, tag = 'internal scratch']
  %s0 = inlined_call_operand.hbm [shape: f32[8,32], index: 0, kind: input, shape index: {}]
  %s1 = inlined_call_operand.hbm [shape: bf16[32,128], index: 1, kind: input, shape index: {}]
  %s2 = inlined_call_operand.vmem [shape: f32[1,128], index: 2, kind: input, shape index: {}]
  %s3 = inlined_call_operand.hbm [shape: bf16[128,128], index: 3, kind: input, shape index: {}]
  %s4 = inlined_call_operand.vmem [shape: f32[1,128], index: 4, kind: input, shape index: {}]
  %s5 = inlined_call_operand.hbm [shape: bf16[128,128], index: 5, kind: input, shape index: {}]
  %s6 = inlined_call_operand.vmem [shape: f32[1,128], index: 6, kind: input, shape index: {}]
  %s7 = inlined_call_operand.hbm [shape: f32[8,128], index: 7, kind: output, shape index: {}]
  %s8 = sld [smem:[#allocation0]]
  $region54: #{tpu_custom_call.1} parent=0
    _
  %s10 = ssub.s32 1, %s8
  %s11 = scalar_select 0, %s10, %s8
  $region1: #{tpu_custom_call.1} parent=0
    #allocation2 [shape = 'u8[4096]{0}', space=vmem, size = 0x1000, scoped, tag = 'input window, operand 0, single buffered']
    #allocation3 [shape = 's32[1]{0}', space=sflag, size = 0x4, scoped, tag = 'scoped memory for tpu_custom_call.1']
    #allocation4 [shape = 's32[1]{0}', space=sflag, size = 0x4, scoped, tag = 'scoped memory for tpu_custom_call.1']
    #allocation5 [shape = 'u8[8192]{0}', space=vmem, size = 0x2000, scoped, tag = 'input window, operand 1, single buffered']
    #allocation6 [shape = 's32[1]{0}', space=sflag, size = 0x4, scoped, tag = 'scoped memory for tpu_custom_call.1']
    #allocation7 [shape = 'u8[32768]{0}', space=vmem, size = 0x8000, scoped, tag = 'input window, operand 3, single buffered']
    #allocation8 [shape = 'u8[32768]{0}', space=vmem, size = 0x8000, scoped, tag = 'input window, operand 5, single buffered']
    #allocation9 [shape = 's32[1]{0}', space=sflag, size = 0x4, scoped, tag = 'scoped memory for tpu_custom_call.1']
    #allocation10 [shape = 'u8[4096]{0}', space=vmem, size = 0x1000, scoped, tag = 'output window, operand 0, single buffered']
    %12 = vsyncpa [#allocation3], 0
    %13 = vsyncpa [#allocation6], 0
    %14 = vsyncpa [#allocation9], 0
    %15 = vsyncpa [#allocation4], 0
    // Predicated region
    $region2: #{tpu_custom_call.1} parent=1 // pred_check
      _
    $region3: #{tpu_custom_call.1} parent=1 // pred_check_branch
      %17 = sbr.rel (0) target = $region5
    $region4: #{tpu_custom_call.1} parent=1 // pred_region
      %s19 = ssub.s32 128, 128
      %20 = vsyncadd [#allocation3], %s19
      %s22 = sshll.u32 [#allocation2], 4
      %s23 = int_to_ptr.vmem [resolvable:$true] %s22
      %25 = dma.hbm_to_vmem [thread:$0]  %s0, 128, %s23, [#allocation3]
    $region5: #{tpu_custom_call.1} parent=1 // pred_fallthru
      _
    // Predicated region
    $region6: #{tpu_custom_call.1} parent=1 // pred_check
      _
    $region7: #{tpu_custom_call.1} parent=1 // pred_check_branch
      %27 = sbr.rel (0) target = $region9
    $region8: #{tpu_custom_call.1} parent=1 // pred_region
      %s29 = ssub.s32 256, 256
      %30 = vsyncadd [#allocation6], %s29
      %s31 = sshll.u32 [#allocation5], 4
      %s32 = int_to_ptr.vmem [resolvable:$true] %s31
      %37 = dma.hbm_to_vmem [thread:$0]  %s1, 256, %s32, [#allocation6], 64, 64, 4
    $region9: #{tpu_custom_call.1} parent=1 // pred_fallthru
      _
    // Predicated region
    $region10: #{tpu_custom_call.1} parent=1 // pred_check
      _
    $region11: #{tpu_custom_call.1} parent=1 // pred_check_branch
      %39 = sbr.rel (0) target = $region13
    $region12: #{tpu_custom_call.1} parent=1 // pred_region
      _
    $region13: #{tpu_custom_call.1} parent=1 // pred_fallthru
      _
    // Predicated region
    $region14: #{tpu_custom_call.1} parent=1 // pred_check
      _
    $region15: #{tpu_custom_call.1} parent=1 // pred_check_branch
      %41 = sbr.rel (0) target = $region17
    $region16: #{tpu_custom_call.1} parent=1 // pred_region
      %s43 = ssub.s32 1024, 1024
      %44 = vsyncadd [#allocation6], %s43
      %s45 = sshll.u32 [#allocation7], 4
      %s46 = int_to_ptr.vmem [resolvable:$true] %s45
      %51 = dma.hbm_to_vmem [thread:$0]  %s3, 1024, %s46, [#allocation6], 64, 64, 4
    $region17: #{tpu_custom_call.1} parent=1 // pred_fallthru
      _
    // Predicated region
    $region18: #{tpu_custom_call.1} parent=1 // pred_check
      _
    $region19: #{tpu_custom_call.1} parent=1 // pred_check_branch
      %53 = sbr.rel (0) target = $region21
    $region20: #{tpu_custom_call.1} parent=1 // pred_region
      _
    $region21: #{tpu_custom_call.1} parent=1 // pred_fallthru
      _
    // Predicated region
    $region22: #{tpu_custom_call.1} parent=1 // pred_check
      _
    $region23: #{tpu_custom_call.1} parent=1 // pred_check_branch
      %55 = sbr.rel (0) target = $region25
    $region24: #{tpu_custom_call.1} parent=1 // pred_region
      %s57 = ssub.s32 1024, 1024
      %58 = vsyncadd [#allocation9], %s57
      %s59 = sshll.u32 [#allocation8], 4
      %s60 = int_to_ptr.vmem [resolvable:$true] %s59
      %65 = dma.hbm_to_vmem [thread:$0]  %s5, 1024, %s60, [#allocation9], 64, 64, 4
    $region25: #{tpu_custom_call.1} parent=1 // pred_fallthru
      _
    // Predicated region
    $region26: #{tpu_custom_call.1} parent=1 // pred_check
      _
    $region27: #{tpu_custom_call.1} parent=1 // pred_check_branch
      %67 = sbr.rel (0) target = $region29
    $region28: #{tpu_custom_call.1} parent=1 // pred_region
      _
    $region29: #{tpu_custom_call.1} parent=1 // pred_fallthru
      _
    // Predicated region
    $region30: #{tpu_custom_call.1} parent=1 // pred_check
      _
    $region31: #{tpu_custom_call.1} parent=1 // pred_check_branch
      %69 = sbr.rel (0) target = $region33
    $region32: #{tpu_custom_call.1} parent=1 // pred_region
      %70 = dma.done [#allocation3], 128
    $region33: #{tpu_custom_call.1} parent=1 // pred_fallthru
      _
    // Predicated region
    $region34: #{tpu_custom_call.1} parent=1 // pred_check
      _
    $region35: #{tpu_custom_call.1} parent=1 // pred_check_branch
      %72 = sbr.rel (0) target = $region37
    $region36: #{tpu_custom_call.1} parent=1 // pred_region
      %73 = dma.done [#allocation6], 256
    $region37: #{tpu_custom_call.1} parent=1 // pred_fallthru
      _
    // Predicated region
    $region38: #{tpu_custom_call.1} parent=1 // pred_check
      _
    $region39: #{tpu_custom_call.1} parent=1 // pred_check_branch
      %75 = sbr.rel (0) target = $region41
    $region40: #{tpu_custom_call.1} parent=1 // pred_region
      %76 = dma.done [#allocation6], 1024
    $region41: #{tpu_custom_call.1} parent=1 // pred_fallthru
      _
    // Predicated region
    $region42: #{tpu_custom_call.1} parent=1 // pred_check
      _
    $region43: #{tpu_custom_call.1} parent=1 // pred_check_branch
      %78 = sbr.rel (0) target = $region45
    $region44: #{tpu_custom_call.1} parent=1 // pred_region
      %79 = dma.done [#allocation9], 1024
    $region45: #{tpu_custom_call.1} parent=1 // pred_fallthru
      _
    %v81 = vld [vmem:[#allocation2] sm:$0xff]
    %v82 = vpack.c.bf16 %v81, %v81
    %v83 = vld [vmem:[#allocation5] sm:$0xf]
    %v84 = vld [vmem:[#allocation5 + $0x4] sm:$0xf]
    %v85 = vld [vmem:[#allocation5 + $0x8] sm:$0xf]
    %v86 = vld [vmem:[#allocation5 + $0xc] sm:$0xf]
    %v87 = vld [vmem:[%s2] sm:$0x1]
    %v89 = vlaneseq
    %v90 = vshrl.u32 %v89, 7
    %v91 = vsub.s32 0, %v90
    %v92 = vrot.slane %v87, %v91
    %v98 = vunpack.c.l.b16 %v83
    %v99 = vunpack.c.l.b16 %v84
    %v100 = vunpack.c.l.b16 %v85
    %v101 = vunpack.c.l.b16 %v86
    %v102 = vpack.c.b16 %v99, %v98
    %v103 = vpack.c.b16 %v101, %v100
    %vm106 = vcmask 261120
    %v108 = vsel %vm106, %v82, 0
    %110 = vmatprep.subr.bf16.mxu0 0
    %111 = vmatpush1.bf16.msra.mxu0 %v102
    %112 = vmatprep.subr.bf16.mxu0 0
    %113 = vmatpush1.bf16.msra.mxu0 %v103
    %114 = vmatprep.subr.bf16.mxu0 0
    %115 = vmatpush1.bf16.msra.mxu0 0
    %116 = vmatprep.subr.bf16.mxu0 0
    %117 = vmatpush1.bf16.msra.mxu0 0
    %118 = vmatprep.subr.bf16.mxu0 0
    %119 = vmatpush1.bf16.msra.mxu0 0
    %120 = vmatprep.subr.bf16.mxu0 0
    %121 = vmatpush1.bf16.msra.mxu0 0
    %122 = vmatprep.subr.bf16.mxu0 0
    %123 = vmatpush1.bf16.msra.mxu0 0
    %124 = vmatprep.subr.bf16.mxu0 0
    %125 = vmatpush1.bf16.msra.mxu0 0
    %126 = vmatprep.subr.bf16.mxu0 0
    %127 = vmatpush1.bf16.msra.mxu0 0
    %128 = vmatprep.subr.bf16.mxu0 0
    %129 = vmatpush1.bf16.msra.mxu0 0
    %130 = vmatprep.subr.bf16.mxu0 0
    %131 = vmatpush1.bf16.msra.mxu0 0
    %132 = vmatprep.subr.bf16.mxu0 0
    %133 = vmatpush1.bf16.msra.mxu0 0
    %134 = vmatprep.subr.bf16.mxu0 0
    %135 = vmatpush1.bf16.msra.mxu0 0
    %136 = vmatprep.subr.bf16.mxu0 0
    %137 = vmatpush1.bf16.msra.mxu0 0
    %138 = vmatprep.subr.bf16.mxu0 0
    %139 = vmatpush1.bf16.msra.mxu0 0
    %140 = vmatprep.subr.bf16.mxu0 0
    %141 = vmatpush1.bf16.msra.mxu0 0
    %142 = vmatprep.mubr.bf16.mxu0 0
    %143 = vmatmul.mubr.bf16.gmra.mrb[0].mxu0 %v108
    %v144 = vpop.f32.mrb[0].mxu0
    %v145 = vadd.f32 %v92, %v144
    %v146 = vpop.f32.mrb[0].mxu0
    %v147 = vpop.f32.mrb[0].mxu0
    %v148 = vpop.f32.mrb[0].mxu0
    %149 = vdwg.mxu0
    %v150 = vmul.f32 %v145, 0.5
    %v151 = vmul.f32 %v145, 0.044715
    %v152 = vmul.f32 %v151, %v145
    %v153 = vmul.f32 %v152, %v145
    %v154 = vadd.f32 %v145, %v153
    %v155 = vmul.f32 %v154, 0.7978846
    %v156 = vtanh.pop %v155
    %v157 = vadd.f32 %v156, 1.0
    %v158 = vmul.f32 %v150, %v157
    %v159 = vpack.c.bf16 %v158, %v158
    %v160 = vld [vmem:[#allocation7] sm:$0xf]
    %v161 = vld [vmem:[#allocation7 + $0x4] sm:$0xf]
    %v162 = vld [vmem:[#allocation7 + $0x8] sm:$0xf]
    %v163 = vld [vmem:[#allocation7 + $0xc] sm:$0xf]
    %v164 = vld [vmem:[#allocation7 + $0x10] sm:$0xf]
    %v165 = vld [vmem:[#allocation7 + $0x14] sm:$0xf]
    %v166 = vld [vmem:[#allocation7 + $0x18] sm:$0xf]
    %v167 = vld [vmem:[#allocation7 + $0x1c] sm:$0xf]
    %v168 = vld [vmem:[#allocation7 + $0x20] sm:$0xf]
    %v169 = vld [vmem:[#allocation7 + $0x24] sm:$0xf]
    %v170 = vld [vmem:[#allocation7 + $0x28] sm:$0xf]
    %v171 = vld [vmem:[#allocation7 + $0x2c] sm:$0xf]
    %v172 = vld [vmem:[#allocation7 + $0x30] sm:$0xf]
    %v173 = vld [vmem:[#allocation7 + $0x34] sm:$0xf]
    %v174 = vld [vmem:[#allocation7 + $0x38] sm:$0xf]
    %v175 = vld [vmem:[#allocation7 + $0x3c] sm:$0xf]
    %v176 = vld [vmem:[%s4] sm:$0x1]
    %v178 = vlaneseq
    %v179 = vshrl.u32 %v178, 7
    %v180 = vsub.s32 0, %v179
    %v181 = vrot.slane %v176, %v180
    %v199 = vunpack.c.l.b16 %v160
    %v200 = vunpack.c.l.b16 %v161
    %v201 = vunpack.c.l.b16 %v162
    %v202 = vunpack.c.l.b16 %v163
    %v203 = vunpack.c.l.b16 %v164
    %v204 = vunpack.c.l.b16 %v165
    %v205 = vunpack.c.l.b16 %v166
    %v206 = vunpack.c.l.b16 %v167
    %v207 = vunpack.c.l.b16 %v168
    %v208 = vunpack.c.l.b16 %v169
    %v209 = vunpack.c.l.b16 %v170
    %v210 = vunpack.c.l.b16 %v171
    %v211 = vunpack.c.l.b16 %v172
    %v212 = vunpack.c.l.b16 %v173
    %v213 = vunpack.c.l.b16 %v174
    %v214 = vunpack.c.l.b16 %v175
    %v215 = vpack.c.b16 %v200, %v199
    %v216 = vpack.c.b16 %v202, %v201
    %v217 = vpack.c.b16 %v204, %v203
    %v218 = vpack.c.b16 %v206, %v205
    %v219 = vpack.c.b16 %v208, %v207
    %v220 = vpack.c.b16 %v210, %v209
    %v221 = vpack.c.b16 %v212, %v211
    %v222 = vpack.c.b16 %v214, %v213
    %231 = vmatprep.subr.bf16.mxu0 0
    %232 = vmatpush1.bf16.msra.mxu0 %v215
    %233 = vmatprep.subr.bf16.mxu0 0
    %234 = vmatpush1.bf16.msra.mxu0 %v216
    %235 = vmatprep.subr.bf16.mxu0 0
    %236 = vmatpush1.bf16.msra.mxu0 %v217
    %237 = vmatprep.subr.bf16.mxu0 0
    %238 = vmatpush1.bf16.msra.mxu0 %v218
    %239 = vmatprep.subr.bf16.mxu0 0
    %240 = vmatpush1.bf16.msra.mxu0 %v219
    %241 = vmatprep.subr.bf16.mxu0 0
    %242 = vmatpush1.bf16.msra.mxu0 %v220
    %243 = vmatprep.subr.bf16.mxu0 0
    %244 = vmatpush1.bf16.msra.mxu0 %v221
    %245 = vmatprep.subr.bf16.mxu0 0
    %246 = vmatpush1.bf16.msra.mxu0 %v222
    %247 = vmatprep.subr.bf16.mxu0 0
    %248 = vmatpush1.bf16.msra.mxu0 0
    %249 = vmatprep.subr.bf16.mxu0 0
    %250 = vmatpush1.bf16.msra.mxu0 0
    %251 = vmatprep.subr.bf16.mxu0 0
    %252 = vmatpush1.bf16.msra.mxu0 0
    %253 = vmatprep.subr.bf16.mxu0 0
    %254 = vmatpush1.bf16.msra.mxu0 0
    %255 = vmatprep.subr.bf16.mxu0 0
    %256 = vmatpush1.bf16.msra.mxu0 0
    %257 = vmatprep.subr.bf16.mxu0 0
    %258 = vmatpush1.bf16.msra.mxu0 0
    %259 = vmatprep.subr.bf16.mxu0 0
    %260 = vmatpush1.bf16.msra.mxu0 0
    %261 = vmatprep.subr.bf16.mxu0 0
    %262 = vmatpush1.bf16.msra.mxu0 0
    %263 = vmatprep.mubr.bf16.mxu0 0
    %264 = vmatmul.mubr.bf16.gmra.mrb[0].mxu0 %v159
    %v265 = vpop.f32.mrb[0].mxu0
    %v266 = vadd.f32 %v181, %v265
    %v267 = vpop.f32.mrb[0].mxu0
    %v268 = vpop.f32.mrb[0].mxu0
    %v269 = vpop.f32.mrb[0].mxu0
    %270 = vdwg.mxu0
    %v271 = vmul.f32 %v266, 0.5
    %v272 = vmul.f32 %v266, 0.044715
    %v273 = vmul.f32 %v272, %v266
    %v274 = vmul.f32 %v273, %v266
    %v275 = vadd.f32 %v266, %v274
    %v276 = vmul.f32 %v275, 0.7978846
    %v277 = vtanh.pop %v276
    %v278 = vadd.f32 %v277, 1.0
    %v279 = vmul.f32 %v271, %v278
    %v280 = vpack.c.bf16 %v279, %v279
    %v281 = vld [vmem:[#allocation8] sm:$0xf]
    %v282 = vld [vmem:[#allocation8 + $0x4] sm:$0xf]
    %v283 = vld [vmem:[#allocation8 + $0x8] sm:$0xf]
    %v284 = vld [vmem:[#allocation8 + $0xc] sm:$0xf]
    %v285 = vld [vmem:[#allocation8 + $0x10] sm:$0xf]
    %v286 = vld [vmem:[#allocation8 + $0x14] sm:$0xf]
    %v287 = vld [vmem:[#allocation8 + $0x18] sm:$0xf]
    %v288 = vld [vmem:[#allocation8 + $0x1c] sm:$0xf]
    %v289 = vld [vmem:[#allocation8 + $0x20] sm:$0xf]
    %v290 = vld [vmem:[#allocation8 + $0x24] sm:$0xf]
    %v291 = vld [vmem:[#allocation8 + $0x28] sm:$0xf]
    %v292 = vld [vmem:[#allocation8 + $0x2c] sm:$0xf]
    %v293 = vld [vmem:[#allocation8 + $0x30] sm:$0xf]
    %v294 = vld [vmem:[#allocation8 + $0x34] sm:$0xf]
    %v295 = vld [vmem:[#allocation8 + $0x38] sm:$0xf]
    %v296 = vld [vmem:[#allocation8 + $0x3c] sm:$0xf]
    %v297 = vld [vmem:[%s6] sm:$0x1]
    %v299 = vlaneseq
    %v300 = vshrl.u32 %v299, 7
    %v301 = vsub.s32 0, %v300
    %v302 = vrot.slane %v297, %v301
    %v320 = vunpack.c.l.b16 %v281
    %v321 = vunpack.c.l.b16 %v282
    %v322 = vunpack.c.l.b16 %v283
    %v323 = vunpack.c.l.b16 %v284
    %v324 = vunpack.c.l.b16 %v285
    %v325 = vunpack.c.l.b16 %v286
    %v326 = vunpack.c.l.b16 %v287
    %v327 = vunpack.c.l.b16 %v288
    %v328 = vunpack.c.l.b16 %v289
    %v329 = vunpack.c.l.b16 %v290
    %v330 = vunpack.c.l.b16 %v291
    %v331 = vunpack.c.l.b16 %v292
    %v332 = vunpack.c.l.b16 %v293
    %v333 = vunpack.c.l.b16 %v294
    %v334 = vunpack.c.l.b16 %v295
    %v335 = vunpack.c.l.b16 %v296
    %v336 = vpack.c.b16 %v321, %v320
    %v337 = vpack.c.b16 %v323, %v322
    %v338 = vpack.c.b16 %v325, %v324
    %v339 = vpack.c.b16 %v327, %v326
    %v340 = vpack.c.b16 %v329, %v328
    %v341 = vpack.c.b16 %v331, %v330
    %v342 = vpack.c.b16 %v333, %v332
    %v343 = vpack.c.b16 %v335, %v334
    %352 = vmatprep.subr.bf16.mxu0 0
    %353 = vmatpush1.bf16.msra.mxu0 %v336
    %354 = vmatprep.subr.bf16.mxu0 0
    %355 = vmatpush1.bf16.msra.mxu0 %v337
    %356 = vmatprep.subr.bf16.mxu0 0
    %357 = vmatpush1.bf16.msra.mxu0 %v338
    %358 = vmatprep.subr.bf16.mxu0 0
    %359 = vmatpush1.bf16.msra.mxu0 %v339
    %360 = vmatprep.subr.bf16.mxu0 0
    %361 = vmatpush1.bf16.msra.mxu0 %v340
    %362 = vmatprep.subr.bf16.mxu0 0
    %363 = vmatpush1.bf16.msra.mxu0 %v341
    %364 = vmatprep.subr.bf16.mxu0 0
    %365 = vmatpush1.bf16.msra.mxu0 %v342
    %366 = vmatprep.subr.bf16.mxu0 0
    %367 = vmatpush1.bf16.msra.mxu0 %v343
    %368 = vmatprep.subr.bf16.mxu0 0
    %369 = vmatpush1.bf16.msra.mxu0 0
    %370 = vmatprep.subr.bf16.mxu0 0
    %371 = vmatpush1.bf16.msra.mxu0 0
    %372 = vmatprep.subr.bf16.mxu0 0
    %373 = vmatpush1.bf16.msra.mxu0 0
    %374 = vmatprep.subr.bf16.mxu0 0
    %375 = vmatpush1.bf16.msra.mxu0 0
    %376 = vmatprep.subr.bf16.mxu0 0
    %377 = vmatpush1.bf16.msra.mxu0 0
    %378 = vmatprep.subr.bf16.mxu0 0
    %379 = vmatpush1.bf16.msra.mxu0 0
    %380 = vmatprep.subr.bf16.mxu0 0
    %381 = vmatpush1.bf16.msra.mxu0 0
    %382 = vmatprep.subr.bf16.mxu0 0
    %383 = vmatpush1.bf16.msra.mxu0 0
    %384 = vmatprep.mubr.bf16.mxu0 0
    %385 = vmatmul.mubr.bf16.gmra.mrb[0].mxu0 %v280
    %v386 = vpop.f32.mrb[0].mxu0
    %v387 = vadd.f32 %v302, %v386
    %v388 = vpop.f32.mrb[0].mxu0
    %v389 = vpop.f32.mrb[0].mxu0
    %v390 = vpop.f32.mrb[0].mxu0
    %391 = vdwg.mxu0
    %392 = vst [vmem:[#allocation10] sm:$0xff] %v387
    // Predicated region
    $region46: #{tpu_custom_call.1} parent=1 // pred_check
      _
    $region47: #{tpu_custom_call.1} parent=1 // pred_check_branch
      %394 = sbr.rel (0) target = $region49
    $region48: #{tpu_custom_call.1} parent=1 // pred_region
      %s396 = ssub.s32 128, 128
      %397 = vsyncadd [#allocation4], %s396
      %s399 = sshll.u32 [#allocation10], 4
      %s400 = int_to_ptr.vmem [resolvable:$true] %s399
      %402 = dma.vmem_to_hbm [thread:$0]  %s400, 128, %s7, [#allocation4]
    $region49: #{tpu_custom_call.1} parent=1 // pred_fallthru
      _
    // Predicated region
    $region50: #{tpu_custom_call.1} parent=1 // pred_check
      _
    $region51: #{tpu_custom_call.1} parent=1 // pred_check_branch
      %404 = sbr.rel (0) target = $region53
    $region52: #{tpu_custom_call.1} parent=1 // pred_region
      %405 = dma.done [#allocation4], 128
    $region53: #{tpu_custom_call.1} parent=1 // pred_fallthru
      _
    %406 = vsyncpa [#allocation3], 1
    %407 = vsyncpa [#allocation6], 1
    %408 = vsyncpa [#allocation9], 1
    %409 = vsyncpa [#allocation4], 1

</llo_original>
